<compile_context>
chip_gen: v5e
topology: v5e:2x2
jax: 0.10.0
libtpu: 0.0.40
codegen_flags: <defaults>
</compile_context>

<pallas_src>
import functools

import jax
import jax.numpy as jnp
from jax import lax
from jax.experimental import pallas as pl
from jax.experimental.pallas import tpu as pltpu


def _pen1_mean_kernel(x_ref, w_ref, b_ref, o_ref, *, mxu_dtype):
    # x_ref: (TB, N, D_in)       fused batch block
    # w_ref: (D_out_pad, D_in)   torch Linear layout (no wrapper transpose)
    # b_ref: (1, D_out_pad)      zero-padded bias
    # o_ref: (TB, N, D_out_pad)  lane-dense output slab
    tb, n, d_in = x_ref.shape
    d_out_pad = o_ref.shape[-1]

    x = x_ref[...].astype(jnp.float32)            # mean/centering in f32
    xm = jnp.mean(x, axis=1, keepdims=True)       # per-batch mean over set axis (torch dim 1)
    xc = (x - xm).reshape(tb * n, d_in)           # fused M dim = TB*N

    lhs = xc.astype(mxu_dtype)
    rhs = w_ref[...].astype(mxu_dtype)
    # (TB*N, D_in) @ (D_out_pad, D_in)^T  -- contract over D_in of both operands.
    y = lax.dot_general(lhs, rhs, (((1,), (1,)), ((), ())),
                        preferred_element_type=jnp.float32)
    y = y + b_ref[...].astype(jnp.float32)        # (1, D_out_pad) broadcasts over rows
    o_ref[...] = y.reshape(tb, n, d_out_pad).astype(o_ref.dtype)


def pen1_mean(x, weight, bias, *, tb=8, mxu_dtype=None):
    """x: (B, N, D_in); weight: (D_out, D_in) torch layout; bias: (D_out,).

    mxu_dtype: optional matmul-input dtype (e.g. jnp.bfloat16 on v6e/v7x when
    the accuracy budget allows); mean/subtract/accumulation stay in f32.
    """
    B, N, D_in = x.shape
    D_out = weight.shape[0]
    if mxu_dtype is None:
        mxu_dtype = jnp.float32

    # Lane-dense output: pad D_out up to a multiple of 128 with zero rows/entries.
    D_out_pad = ((D_out + 127) // 128) * 128
    if D_out_pad != D_out:
        weight_p = jnp.pad(weight, ((0, D_out_pad - D_out), (0, 0)))
        bias_p = jnp.pad(bias, (0, D_out_pad - D_out))
    else:
        weight_p, bias_p = weight, bias
    bias_p = bias_p.reshape(1, D_out_pad)

    tb = max(1, min(tb, B))
    grid_b = pl.cdiv(B, tb)

    # Explicit VMEM budget: double-buffered x/out blocks + resident weight/bias,
    # with headroom; capped at 48 MiB (safe under v7x's 64 MiB physical VMEM).
    x_bytes = tb * N * D_in * jnp.dtype(x.dtype).itemsize
    o_bytes = tb * N * D_out_pad * jnp.dtype(x.dtype).itemsize
    w_bytes = D_out_pad * D_in * jnp.dtype(weight_p.dtype).itemsize
    b_bytes = D_out_pad * 4
    vmem_need = 2 * (x_bytes + o_bytes) + 2 * (w_bytes + b_bytes)
    vmem_limit = int(min(max(4 * vmem_need, 32 * 1024 * 1024), 48 * 1024 * 1024))

    kernel = functools.partial(_pen1_mean_kernel, mxu_dtype=mxu_dtype)

    out_padded = pl.pallas_call(
        kernel,
        out_shape=jax.ShapeDtypeStruct((B, N, D_out_pad), x.dtype),
        grid_spec=pltpu.PrefetchScalarGridSpec(
            num_scalar_prefetch=0,
            grid=(grid_b,),
            in_specs=[
                pl.BlockSpec((tb, N, D_in), lambda b: (b, 0, 0)),
                pl.BlockSpec((D_out_pad, D_in), lambda b: (0, 0)),
                pl.BlockSpec((1, D_out_pad), lambda b: (0, 0)),
            ],
            out_specs=pl.BlockSpec((tb, N, D_out_pad), lambda b: (b, 0, 0)),
        ),
        compiler_params=pltpu.CompilerParams(
            dimension_semantics=("parallel",),
            vmem_limit_bytes=vmem_limit,
        ),
    )(x, weight_p, bias_p)

    if D_out_pad != D_out:
        out_padded = out_padded[..., :D_out]
    return out_padded


def reference(x, weight, bias):
    xm = jnp.mean(x, axis=1, keepdims=True)
    return (x - xm) @ weight.T + bias


if __name__ == "__main__":
    B, N, D_in, D_out = 4, 8, 32, 32

    key = jax.random.PRNGKey(0)
    kx, kw, kb = jax.random.split(key, 3)

    # Deterministic parameter init mimicking nn.Linear: U(-1/sqrt(in_dim), 1/sqrt(in_dim)).
    bound = 1.0 / (D_in ** 0.5)
    weight = jax.random.uniform(kw, (D_out, D_in), jnp.float32, -bound, bound)
    bias = jax.random.uniform(kb, (D_out,), jnp.float32, -bound, bound)

    x = jax.random.normal(kx, (B, N, D_in), jnp.float32)

    out = pen1_mean(x, weight, bias)
    out = jax.block_until_ready(out)

    ref = reference(x, weight, bias)
    assert out.shape == (B, N, D_out)
    assert jnp.allclose(out, ref, atol=1e-5, rtol=1e-5), "mismatch vs reference"

    print("KERNEL_OK")
</pallas_src>

<mosaic_0001>
module attributes {stable_mosaic.version = 11 : i64} {
  func.func @_pen1_mean_kernel(%arg0: i32, %arg1: memref<4x8x32xf32, #tpu.memory_space<vmem>>, %arg2: memref<128x32xf32, #tpu.memory_space<vmem>>, %arg3: memref<1x128xf32, #tpu.memory_space<vmem>>, %arg4: memref<4x8x128xf32, #tpu.memory_space<vmem>>) attributes {dimension_semantics = [#tpu.dimension_semantics<parallel>], iteration_bounds = array<i64: 1>, scalar_prefetch = 0 : i64, scratch_operands = 0 : i64, tpu.core_type = #tpu.core_type<tc>, window_params = [{transform_indices = @transform_0, window_bounds = array<i64: 4, 8, 32>}, {pipeline_mode = #tpu.pipeline_mode<synchronous>, transform_indices = @transform_1, window_bounds = array<i64: 128, 32>}, {pipeline_mode = #tpu.pipeline_mode<synchronous>, transform_indices = @transform_2, window_bounds = array<i64: 1, 128>}, {transform_indices = @transform_3, window_bounds = array<i64: 4, 8, 128>}]} {
    %c0 = arith.constant 0 : index
    %c0_0 = arith.constant 0 : index
    %c0_1 = arith.constant 0 : index
    %0 = vector.load %arg1[%c0, %c0_0, %c0_1] : memref<4x8x32xf32, #tpu.memory_space<vmem>>, vector<4x8x32xf32>
    %cst = arith.constant dense<0.000000e+00> : vector<4x32xf32>
    %1 = vector.multi_reduction <add>, %0, %cst [1] : vector<4x8x32xf32> to vector<4x32xf32>
    %2 = vector.shape_cast %1 : vector<4x32xf32> to vector<4x1x32xf32>
    %cst_2 = arith.constant 8.000000e+00 : f32
    %3 = vector.broadcast %cst_2 : f32 to vector<4x1x32xf32>
    %4 = arith.divf %2, %3 : vector<4x1x32xf32>
    %5 = vector.broadcast %4 : vector<4x1x32xf32> to vector<4x8x32xf32>
    %6 = arith.subf %0, %5 : vector<4x8x32xf32>
    %7 = vector.shape_cast %6 : vector<4x8x32xf32> to vector<32x32xf32>
    %c0_3 = arith.constant 0 : index
    %c0_4 = arith.constant 0 : index
    %8 = vector.load %arg2[%c0_3, %c0_4] : memref<128x32xf32, #tpu.memory_space<vmem>>, vector<128x32xf32>
    %cst_5 = arith.constant dense<0.000000e+00> : vector<32x128xf32>
    %9 = tpu.matmul %7, %8, %cst_5 {dimension_numbers = #tpu.dot_dimension_numbers<[1], [1], [0], [0], [0, 0, 1, 0], [], []>} : vector<32x32xf32>, vector<128x32xf32>, vector<32x128xf32> -> vector<32x128xf32>
    %c0_6 = arith.constant 0 : index
    %c0_7 = arith.constant 0 : index
    %10 = vector.load %arg3[%c0_6, %c0_7] : memref<1x128xf32, #tpu.memory_space<vmem>>, vector<1x128xf32>
    %11 = vector.broadcast %10 : vector<1x128xf32> to vector<32x128xf32>
    %12 = arith.addf %9, %11 : vector<32x128xf32>
    %13 = vector.shape_cast %12 : vector<32x128xf32> to vector<4x8x128xf32>
    %c0_8 = arith.constant 0 : index
    %c0_9 = arith.constant 0 : index
    %c0_10 = arith.constant 0 : index
    %14 = vector.load %arg4[%c0_8, %c0_9, %c0_10] : memref<4x8x128xf32, #tpu.memory_space<vmem>>, vector<4x8x128xf32>
    tpu.vector_store %arg4[%c0_8, %c0_9, %c0_10], %13 {strides = array<i32>} : memref<4x8x128xf32, #tpu.memory_space<vmem>>, vector<4x8x128xf32>,
    return
  }
  func.func @transform_0(%arg0: i32) -> (i32, i32, i32) {
    %c0_i32 = arith.constant 0 : i32
    %c0_i32_0 = arith.constant 0 : i32
    %c0_i32_1 = arith.constant 0 : i32
    return %arg0, %c0_i32, %c0_i32_0 : i32, i32, i32
  }
  func.func @transform_1(%arg0: i32) -> (i32, i32) {
    %c0_i32 = arith.constant 0 : i32
    %c0_i32_0 = arith.constant 0 : i32
    %c0_i32_1 = arith.constant 0 : i32
    return %c0_i32, %c0_i32_0 : i32, i32
  }
  func.func @transform_2(%arg0: i32) -> (i32, i32) {
    %c0_i32 = arith.constant 0 : i32
    %c0_i32_0 = arith.constant 0 : i32
    %c0_i32_1 = arith.constant 0 : i32
    return %c0_i32, %c0_i32_0 : i32, i32
  }
  func.func @transform_3(%arg0: i32) -> (i32, i32, i32) {
    %c0_i32 = arith.constant 0 : i32
    %c0_i32_0 = arith.constant 0 : i32
    %c0_i32_1 = arith.constant 0 : i32
    return %arg0, %c0_i32, %c0_i32_0 : i32, i32, i32
  }
}

</mosaic_0001>

<llo_original>
// kernel: tpu_custom_call.1
$region0: #{tpu_custom_call.1}
  #allocation0 [shape = 'u32[]', space=smem, size = 0x4, offset = 0x4, fixed_abs, tag = 'smem constant byte address 0x4 - core index']
  #allocation1 [shape = 'u32[72,128]{1,0:T(1,128)}', space=vmem, size = 0x9000, scoped, tag = 'internal scratch']
  %s0 = inlined_call_operand.vmem [shape: f32[4,8,32], index: 0, kind: input, shape index: {}]
  %s1 = inlined_call_operand.vmem [shape: f32[128,32], index: 1, kind: input, shape index: {}]
  %s2 = inlined_call_operand.vmem [shape: f32[1,128], index: 2, kind: input, shape index: {}]
  %s3 = inlined_call_operand.hbm [shape: f32[4,8,128], index: 3, kind: output, shape index: {}]
  %s4 = sld [smem:[#allocation0]]
  $region22: #{tpu_custom_call.1} parent=0
    _
  %s6 = ssub.s32 1, %s4
  %s7 = scalar_select 0, %s6, %s4
  $region1: #{tpu_custom_call.1} parent=0
    #allocation2 [shape = 'u8[16384]{0}', space=vmem, size = 0x4000, scoped, tag = 'output window, operand 0, single buffered']
    #allocation3 [shape = 's32[1]{0}', space=sflag, size = 0x4, scoped, tag = 'scoped memory for tpu_custom_call.1']
    %8 = vsyncpa [#allocation3], 0
    // Predicated region
    $region2: #{tpu_custom_call.1} parent=1 // pred_check
      _
    $region3: #{tpu_custom_call.1} parent=1 // pred_check_branch
      %10 = sbr.rel (0) target = $region5
    $region4: #{tpu_custom_call.1} parent=1 // pred_region
      _
    $region5: #{tpu_custom_call.1} parent=1 // pred_fallthru
      _
    // Predicated region
    $region6: #{tpu_custom_call.1} parent=1 // pred_check
      _
    $region7: #{tpu_custom_call.1} parent=1 // pred_check_branch
      %12 = sbr.rel (0) target = $region9
    $region8: #{tpu_custom_call.1} parent=1 // pred_region
      _
    $region9: #{tpu_custom_call.1} parent=1 // pred_fallthru
      _
    // Predicated region
    $region10: #{tpu_custom_call.1} parent=1 // pred_check
      _
    $region11: #{tpu_custom_call.1} parent=1 // pred_check_branch
      %14 = sbr.rel (0) target = $region13
    $region12: #{tpu_custom_call.1} parent=1 // pred_region
      _
    $region13: #{tpu_custom_call.1} parent=1 // pred_fallthru
      _
    %v15 = vld [vmem:[%s0] sm:$0xff]
    %v16 = vld [vmem:[%s0 + $0x8] sm:$0xff]
    %v17 = vld [vmem:[%s0 + $0x10] sm:$0xff]
    %v18 = vld [vmem:[%s0 + $0x18] sm:$0xff]
    %vm19 = vcmask 261120
    %v20 = vsel %vm19, %v15, 0.0
    %v21 = vrot.slane %v20, 4
    %v22 = vadd.f32 %v20, %v21
    %v23 = vrot.slane %v22, 2
    %v24 = vadd.f32 %v22, %v23
    %v25 = vrot.slane %v24, 1
    %v26 = vadd.f32 %v24, %v25
    %v27 = vsel %vm19, %v16, 0.0
    %v28 = vrot.slane %v27, 4
    %v29 = vadd.f32 %v27, %v28
    %v30 = vrot.slane %v29, 2
    %v31 = vadd.f32 %v29, %v30
    %v32 = vrot.slane %v31, 1
    %v33 = vadd.f32 %v31, %v32
    %v34 = vsel %vm19, %v17, 0.0
    %v35 = vrot.slane %v34, 4
    %v36 = vadd.f32 %v34, %v35
    %v37 = vrot.slane %v36, 2
    %v38 = vadd.f32 %v36, %v37
    %v39 = vrot.slane %v38, 1
    %v40 = vadd.f32 %v38, %v39
    %v41 = vsel %vm19, %v18, 0.0
    %v42 = vrot.slane %v41, 4
    %v43 = vadd.f32 %v41, %v42
    %v44 = vrot.slane %v43, 2
    %v45 = vadd.f32 %v43, %v44
    %v46 = vrot.slane %v45, 1
    %v47 = vadd.f32 %v45, %v46
    %v48 = vrcp.pop 8.0
    %v49 = vmul.f32 8.0, %v48
    %v50 = vsub.f32 1.0, %v49
    %v51 = vmul.f32 %v48, %v50
    %v52 = vadd.f32 %v48, %v51
    %vm53 = vweird.f32 %v48
    %v54 = vsel %vm53, %v48, %v52
    %v55 = vmul.f32 %v26, %v54
    %v56 = vmul.f32 %v33, %v54
    %v57 = vmul.f32 %v40, %v54
    %v58 = vmul.f32 %v47, %v54
    %v59 = vsub.f32 %v15, %v55
    %v60 = vsub.f32 %v16, %v56
    %v61 = vsub.f32 %v17, %v57
    %v62 = vsub.f32 %v18, %v58
    %v63 = vld [vmem:[%s1] sm:$0xff]
    %v64 = vld [vmem:[%s1 + $0x8] sm:$0xff]
    %v65 = vld [vmem:[%s1 + $0x10] sm:$0xff]
    %v66 = vld [vmem:[%s1 + $0x18] sm:$0xff]
    %v67 = vld [vmem:[%s1 + $0x20] sm:$0xff]
    %v68 = vld [vmem:[%s1 + $0x28] sm:$0xff]
    %v69 = vld [vmem:[%s1 + $0x30] sm:$0xff]
    %v70 = vld [vmem:[%s1 + $0x38] sm:$0xff]
    %v71 = vld [vmem:[%s1 + $0x40] sm:$0xff]
    %v72 = vld [vmem:[%s1 + $0x48] sm:$0xff]
    %v73 = vld [vmem:[%s1 + $0x50] sm:$0xff]
    %v74 = vld [vmem:[%s1 + $0x58] sm:$0xff]
    %v75 = vld [vmem:[%s1 + $0x60] sm:$0xff]
    %v76 = vld [vmem:[%s1 + $0x68] sm:$0xff]
    %v77 = vld [vmem:[%s1 + $0x70] sm:$0xff]
    %v78 = vld [vmem:[%s1 + $0x78] sm:$0xff]
    %v79 = vld [vmem:[%s2] sm:$0x1]
    %v81 = vperm.slane %v79, 0
    %v84 = vsel %vm19, %v59, 0
    %v87 = vsel %vm19, %v60, 0
    %v90 = vsel %vm19, %v61, 0
    %v93 = vsel %vm19, %v62, 0
    %v96 = vsel %vm19, %v63, 0
    %v99 = vsel %vm19, %v64, 0
    %v102 = vsel %vm19, %v65, 0
    %v105 = vsel %vm19, %v66, 0
    %v108 = vsel %vm19, %v67, 0
    %v111 = vsel %vm19, %v68, 0
    %v114 = vsel %vm19, %v69, 0
    %v117 = vsel %vm19, %v70, 0
    %v120 = vsel %vm19, %v71, 0
    %v123 = vsel %vm19, %v72, 0
    %v126 = vsel %vm19, %v73, 0
    %v129 = vsel %vm19, %v74, 0
    %v132 = vsel %vm19, %v75, 0
    %v135 = vsel %vm19, %v76, 0
    %v138 = vsel %vm19, %v77, 0
    %v141 = vsel %vm19, %v78, 0
    %143 = vmatpush.xpose.msra.mxu0 %v141
    %144 = vmatpush.xpose.msra.mxu0 %v138
    %145 = vmatpush.xpose.msra.mxu0 %v135
    %146 = vmatpush.xpose.msra.mxu0 %v132
    %147 = vmatpush.xpose.msra.mxu0 %v129
    %148 = vmatpush.xpose.msra.mxu0 %v126
    %149 = vmatpush.xpose.msra.mxu0 %v123
    %150 = vmatpush.xpose.msra.mxu0 %v120
    %151 = vmatpush.xpose.msra.mxu0 %v117
    %152 = vmatpush.xpose.msra.mxu0 %v114
    %153 = vmatpush.xpose.msra.mxu0 %v111
    %154 = vmatpush.xpose.msra.mxu0 %v108
    %155 = vmatpush.xpose.msra.mxu0 %v105
    %156 = vmatpush.xpose.msra.mxu0 %v102
    %157 = vmatpush.xpose.msra.mxu0 %v99
    %158 = vmatpush.xpose.msra.mxu0 %v96
    %159 = vmatmul.f32.gmra.mxu0 %v84
    %v160 = vpop.f32.mrf.mxu0
    %v161 = vadd.f32 %v81, %v160
    %162 = vmatmul.f32.gmra.mxu0 %v87
    %v163 = vpop.f32.mrf.mxu0
    %v164 = vadd.f32 %v81, %v163
    %165 = vmatmul.f32.gmra.mxu0 %v90
    %v166 = vpop.f32.mrf.mxu0
    %v167 = vadd.f32 %v81, %v166
    %168 = vmatmul.f32.gmra.mxu0 %v93
    %v169 = vpop.f32.mrf.mxu0
    %v170 = vadd.f32 %v81, %v169
    %171 = vdwg.mxu0
    %172 = vst [vmem:[#allocation2] sm:$0xff] %v161
    %173 = vst [vmem:[#allocation2 + $0x8] sm:$0xff] %v164
    %174 = vst [vmem:[#allocation2 + $0x10] sm:$0xff] %v167
    %175 = vst [vmem:[#allocation2 + $0x18] sm:$0xff] %v170
    // Predicated region
    $region14: #{tpu_custom_call.1} parent=1 // pred_check
      _
    $region15: #{tpu_custom_call.1} parent=1 // pred_check_branch
      %177 = sbr.rel (0) target = $region17
    $region16: #{tpu_custom_call.1} parent=1 // pred_region
      %179 = vsyncadd [#allocation3], 0
      %s180 = sshll.u32 [#allocation2], 4
      %s181 = int_to_ptr.vmem [resolvable:$true] %s180
      %s182 = sshll.u32 %s3, 4
      %s183 = int_to_ptr.hbm [resolvable:$true] %s182
      %188 = dma.vmem_to_hbm [thread:$0]  %s181, 512, %s183, [#allocation3], 128, 128, 8
    $region17: #{tpu_custom_call.1} parent=1 // pred_fallthru
      _
    // Predicated region
    $region18: #{tpu_custom_call.1} parent=1 // pred_check
      _
    $region19: #{tpu_custom_call.1} parent=1 // pred_check_branch
      %190 = sbr.rel (0) target = $region21
    $region20: #{tpu_custom_call.1} parent=1 // pred_region
      %192 = dma.done [#allocation3], 512
    $region21: #{tpu_custom_call.1} parent=1 // pred_fallthru
      _
    %193 = vsyncpa [#allocation3], 1

</llo_original>
